<compile_context>
chip_gen: v6e
topology: v6e:2x2x1
jax: 0.10.0
libtpu: 0.0.40
codegen_flags: <defaults>
</compile_context>

<pallas_src>
import numpy as np
import jax
import jax.numpy as jnp
from jax import lax
from jax.experimental import pallas as pl
from jax.experimental.pallas import tpu as pltpu

# ----- static multi-task configuration (would come from the module ctor) -----
TASKS = ("d", "xy", "whl")      # synthetic task names
TASK_DIMS = (2, 2, 4)           # columns per task  -> D = 8
LAMBDAS = (1.0, 1.0, 1.0)       # all in {0.0, 1.0} as asserted in __init__
NUM_TASKS = len(TASK_DIMS)
D_TOTAL = sum(TASK_DIMS)
LANES = 128

# 2 MiB/input tile (f32); 2 inputs x 2 buffers x 2 MiB = 8 MiB of streaming VMEM -> safe on
# v5e's 16 MiB scoped default, good step-overhead amortization on v6e.  On v7x (3.2 TB/s HBM,
# 32 MiB scoped VMEM) raise to 8192 (and optionally pipeline_mode=pl.Buffered(3)).
DEFAULT_MAX_ROWS = 4096
NUM_CORES = 2                   # v7x TensorCores; on 1-TC chips the "parallel" axis iterates.


def _accumulate(out_ref, lab_ref, acc_ref, *, tr, rows, need_mask, tile_idx):
    """One streaming step: acc(8,128) += |out - lab| with deferred cross-sublane reduce."""
    diff = jnp.abs(out_ref[...].astype(jnp.float32) - lab_ref[...].astype(jnp.float32))
    if need_mask:  # static: only emitted when the last tile is ragged / a tile is fully OOB
        limit = rows - tile_idx * tr                      # valid rows in this tile
        row = lax.broadcasted_iota(jnp.int32, (tr, LANES), 0)
        diff = jnp.where(row < limit, diff, 0.0)
    if tr % 8 == 0:
        # Pure VALU vreg adds; sublane collapse deferred to the epilogue.
        acc_ref[...] += diff.reshape(tr // 8, 8, LANES).sum(axis=0)
    else:
        # Only reachable for tiny single-block cases (tr == rows, rows not multiple of 8).
        acc_ref[0:1, :] += jnp.sum(diff, axis=0, keepdims=True)


def _make_single_core_kernel(*, tr, rows, task_cols, coeffs, num_tasks, d_per_row, need_mask):
    """1-D grid kernel: streams |o-g|, finalize does per-task scale + exp in-kernel."""

    def kernel(out_ref, lab_ref, logsig_ref, loss_ref, lv_ref, acc_ref):
        i = pl.program_id(0)

        @pl.when(i == 0)
        def _():
            acc_ref[...] = jnp.zeros_like(acc_ref)

        _accumulate(out_ref, lab_ref, acc_ref, tr=tr, rows=rows,
                    need_mask=need_mask, tile_idx=i)

        @pl.when(i == pl.num_programs(0) - 1)
        def _():
            lane_sums = jnp.sum(acc_ref[...], axis=0, keepdims=True)       # (1,128), one XLU reduce
            # lane -> original column mapping (128 % D == 0; zero-padded lanes contribute 0)
            col = lax.broadcasted_iota(jnp.int32, (1, LANES), 1) % d_per_row
            tvec = lax.broadcasted_iota(jnp.int32, (1, num_tasks), 1)
            base = jnp.zeros((1, num_tasks), jnp.float32)
            lsig = jnp.zeros((1, num_tasks), jnp.float32)
            for t, (lo, hi) in enumerate(task_cols):                        # static, T small
                s_t = jnp.sum(jnp.where((col >= lo) & (col < hi), lane_sums, 0.0))
                base = jnp.where(tvec == t, coeffs[t] * s_t, base)
                lsig = jnp.where(tvec == t, logsig_ref[t], lsig)            # SMEM scalar read
            lv = base * jnp.exp(-2.0 * lsig)                                # EUP exp; no divides
            lv_ref[...] = lv
            loss_ref[...] = (jnp.sum(lv) + jnp.sum(lsig)).reshape(1, 1)

    return kernel


def _make_multi_core_kernel(*, tr, rows, spc, need_mask):
    """2-D grid kernel (core, step): per-core partial (8,128) abs-diff sums."""

    def kernel(out_ref, lab_ref, partial_ref, acc_ref):
        c = pl.program_id(0)
        i = pl.program_id(1)

        @pl.when(i == 0)
        def _():
            acc_ref[...] = jnp.zeros_like(acc_ref)

        _accumulate(out_ref, lab_ref, acc_ref, tr=tr, rows=rows,
                    need_mask=need_mask, tile_idx=c * spc + i)

        @pl.when(i == pl.num_programs(1) - 1)
        def _():
            partial_ref[...] = acc_ref[...].reshape(1, 8, LANES)

    return kernel


def auto_tune_multi_task_loss(outputs, labels, log_sigmas, *,
                              max_rows=DEFAULT_MAX_ROWS, force_multicore=False):
    """Pallas implementation of AutoTuneMultiTaskLoss.forward (phase='train').

    outputs, labels: (B, D_TOTAL) float32 or bfloat16
    log_sigmas:      (NUM_TASKS,) float32 (learnable parameter, zero-initialized)
    Returns (loss: scalar, loss_values: (NUM_TASKS,)).
    """
    B, D = outputs.shape
    assert D == D_TOTAL
    assert LANES % D == 0, "lane-dense repack requires D to divide 128"
    T = NUM_TASKS

    # Lane-dense repack: (B, D) row-major flattened == (rows, 128) row-major (free reshape).
    total = B * D
    rows = -(-total // LANES)
    lane_pad = rows * LANES - total        # < 128; non-zero only when B*D % 128 != 0

    def repack(x):
        flat = x.reshape(-1)               # dtype preserved: bf16 streams as bf16
        if lane_pad:
            # TODO(synk): a fully copy-free path for misaligned B*D would stream the aligned
            # prefix and a separate ragged tail; the <=127-element zero pad is the minimum.
            flat = jnp.pad(flat, (0, lane_pad))
        return flat.reshape(rows, LANES)

    o2 = repack(outputs)
    l2 = repack(labels)
    log_sig = log_sigmas.astype(jnp.float32).reshape(T)

    # Static per-task config baked into the kernel closure.
    task_cols, coeffs = [], []
    c0 = 0
    for lam, d in zip(LAMBDAS, TASK_DIMS):
        task_cols.append((c0, c0 + d))
        coeffs.append(float(lam) * 0.5 / float(B * d))   # lambda / (2 * B * d)
        c0 += d
    task_cols, coeffs = tuple(task_cols), tuple(coeffs)

    # Tile selection: one full block when it fits, else max_rows rounded down to sublane mult.
    if rows <= max_rows:
        tr = rows
    else:
        tr = max(8, (max_rows // 8) * 8)
    steps = -(-rows // tr)
    use_multicore = force_multicore or steps >= 2 * NUM_CORES

    if not use_multicore:
        # ---- single-core path: full epilogue in-kernel, no wrapper post-ops ----
        need_mask = (rows % tr) != 0
        kernel = _make_single_core_kernel(tr=tr, rows=rows, task_cols=task_cols,
                                          coeffs=coeffs, num_tasks=T, d_per_row=D,
                                          need_mask=need_mask)
        loss, lv = pl.pallas_call(
            kernel,
            out_shape=(
                jax.ShapeDtypeStruct((1, 1), jnp.float32),
                jax.ShapeDtypeStruct((1, T), jnp.float32),
            ),
            grid_spec=pltpu.PrefetchScalarGridSpec(
                num_scalar_prefetch=0,
                grid=(steps,),
                in_specs=[
                    pl.BlockSpec((tr, LANES), lambda i: (i, 0)),              # outputs
                    pl.BlockSpec((tr, LANES), lambda i: (i, 0)),              # labels
                    pl.BlockSpec(memory_space=pltpu.MemorySpace.SMEM),        # log_sigmas
                ],
                out_specs=(
                    pl.BlockSpec((1, 1), lambda i: (0, 0)),                   # total loss
                    pl.BlockSpec((1, T), lambda i: (0, 0)),                   # per-task losses
                ),
                scratch_shapes=[pltpu.VMEM((8, LANES), jnp.float32)],
            ),
            compiler_params=pltpu.CompilerParams(dimension_semantics=("arbitrary",)),
        )(o2, l2, log_sig)
        return loss[0, 0], lv[0]

    # ---- multicore path (v7x 2-TC split; harmless sequential loop on 1-TC chips) ----
    spc = -(-steps // NUM_CORES)                      # tiles per core
    need_mask = (rows % tr != 0) or (steps % NUM_CORES != 0)
    last_tile = steps - 1

    def in_map(c, i):
        # Clamp fully-out-of-range tiles (only exist when steps % NUM_CORES != 0) to the
        # last valid tile; their contribution is zeroed by the in-kernel row mask.
        return (jnp.minimum(c * spc + i, last_tile), 0)

    kernel = _make_multi_core_kernel(tr=tr, rows=rows, spc=spc, need_mask=need_mask)
    partials = pl.pallas_call(
        kernel,
        out_shape=jax.ShapeDtypeStruct((NUM_CORES, 8, LANES), jnp.float32),
        grid_spec=pltpu.PrefetchScalarGridSpec(
            num_scalar_prefetch=0,
            grid=(NUM_CORES, spc),
            in_specs=[
                pl.BlockSpec((tr, LANES), in_map),                            # outputs
                pl.BlockSpec((tr, LANES), in_map),                            # labels
            ],
            out_specs=pl.BlockSpec((1, 8, LANES), lambda c, i: (c, 0, 0)),    # per-core partials
            scratch_shapes=[pltpu.VMEM((8, LANES), jnp.float32)],
        ),
        compiler_params=pltpu.CompilerParams(
            dimension_semantics=("parallel", "arbitrary")),
    )(o2, l2)

    # Tiny combine (negligible vs the streaming work that triggers this path).
    lane_sums = jnp.sum(partials, axis=(0, 1))                    # (128,)
    col_sums = lane_sums.reshape(LANES // D, D).sum(axis=0)       # (D,) per-column |o-g| sums
    lv = jnp.stack([coeffs[t] * jnp.sum(col_sums[lo:hi])
                    for t, (lo, hi) in enumerate(task_cols)])
    lv = lv * jnp.exp(-2.0 * log_sig)
    loss = jnp.sum(lv) + jnp.sum(log_sig)
    return loss, lv


def _reference(outputs, labels, log_sigmas):
    """Pure-JAX reference mirroring the PyTorch forward (train phase)."""
    lvs = []
    c = 0
    for t, d in enumerate(TASK_DIMS):
        o = outputs[:, c:c + d]
        g = labels[:, c:c + d]
        l1 = jnp.mean(jnp.abs(o - g))                       # nn.L1Loss(reduction='mean')
        lvs.append(LAMBDAS[t] * l1 / (2.0 * jnp.exp(log_sigmas[t]) ** 2))
        c += d
    loss_values = jnp.stack(lvs)
    loss = jnp.sum(loss_values) + jnp.sum(log_sigmas)
    return loss, loss_values


def _check(got, want, atol=2e-5):
    loss, lvs = got
    ref_loss, ref_lvs = want
    np.testing.assert_allclose(np.asarray(loss), np.asarray(ref_loss), rtol=1e-5, atol=atol)
    np.testing.assert_allclose(np.asarray(lvs), np.asarray(ref_lvs), rtol=1e-5, atol=atol)


if __name__ == "__main__":
    key = jax.random.PRNGKey(0)
    k1, k2, k3, k4, k5, k6, k7, k8 = jax.random.split(key, 8)

    # 1) Small aligned batch: single grid step, epilogue fully in-kernel.
    B = 16
    outputs = jax.random.normal(k1, (B, D_TOTAL), dtype=jnp.float32)
    labels = jax.random.normal(k2, (B, D_TOTAL), dtype=jnp.float32)
    log_sigmas = jnp.zeros((NUM_TASKS,), dtype=jnp.float32)       # torch.zeros init
    res = auto_tune_multi_task_loss(outputs, labels, log_sigmas)
    jax.block_until_ready(res)
    _check(res, _reference(outputs, labels, log_sigmas))

    # 2) Multi-step accumulation (aligned, no mask), nonzero log_sigmas.
    B2 = 256
    outputs2 = jax.random.normal(k3, (B2, D_TOTAL), dtype=jnp.float32)
    labels2 = jax.random.normal(k4, (B2, D_TOTAL), dtype=jnp.float32)
    log_sigmas2 = jnp.array([0.1, -0.2, 0.3], dtype=jnp.float32)
    ref2 = _reference(outputs2, labels2, log_sigmas2)
    res2 = auto_tune_multi_task_loss(outputs2, labels2, log_sigmas2, max_rows=8)
    jax.block_until_ready(res2)
    _check(res2, ref2)

    # 3) Same data through the two-TensorCore split path (per-core partials + wrapper combine).
    res3 = auto_tune_multi_task_loss(outputs2, labels2, log_sigmas2, max_rows=8,
                                     force_multicore=True)
    jax.block_until_ready(res3)
    _check(res3, ref2)

    # 4) Misaligned batch (lane pad + ragged last grid tile masked in-kernel).
    B4 = 300
    outputs4 = jax.random.normal(k5, (B4, D_TOTAL), dtype=jnp.float32)
    labels4 = jax.random.normal(k6, (B4, D_TOTAL), dtype=jnp.float32)
    ref4 = _reference(outputs4, labels4, log_sigmas2)
    res4 = auto_tune_multi_task_loss(outputs4, labels4, log_sigmas2, max_rows=8)
    jax.block_until_ready(res4)
    _check(res4, ref4)

    # 5) Misaligned + multicore (exercises clamped out-of-range tile + row masking).
    res5 = auto_tune_multi_task_loss(outputs4, labels4, log_sigmas2, max_rows=8,
                                     force_multicore=True)
    jax.block_until_ready(res5)
    _check(res5, ref4)

    # 6) bf16 streaming (no wrapper astype; upcast inside the kernel).
    B6 = 32
    outputs6 = jax.random.normal(k7, (B6, D_TOTAL), dtype=jnp.float32).astype(jnp.bfloat16)
    labels6 = jax.random.normal(k8, (B6, D_TOTAL), dtype=jnp.float32).astype(jnp.bfloat16)
    res6 = auto_tune_multi_task_loss(outputs6, labels6, log_sigmas2)
    jax.block_until_ready(res6)
    _check(res6, _reference(outputs6.astype(jnp.float32), labels6.astype(jnp.float32),
                            log_sigmas2))

    # TODO(synk): phase='val' branch (losses_val + exp(log_sigma) extras) is trivial glue
    # around the same per-task reductions and is not implemented as a separate kernel.
    print("KERNEL_OK")
</pallas_src>

<mosaic_0001>
module attributes {stable_mosaic.version = 11 : i64} {
  func.func @kernel(%arg0: i32, %arg1: memref<1x128xf32, #tpu.memory_space<vmem>>, %arg2: memref<1x128xf32, #tpu.memory_space<vmem>>, %arg3: memref<3xf32, #tpu.memory_space<smem>>, %arg4: memref<1x1xf32, #tpu.memory_space<vmem>>, %arg5: memref<1x3xf32, #tpu.memory_space<vmem>>, %arg6: memref<8x128xf32, #tpu.memory_space<vmem>>) attributes {dimension_semantics = [#tpu.dimension_semantics<arbitrary>], iteration_bounds = array<i64: 1>, scalar_prefetch = 0 : i64, scratch_operands = 1 : i64, tpu.core_type = #tpu.core_type<tc>, window_params = [{transform_indices = @transform_0, window_bounds = array<i64: 1, 128>}, {transform_indices = @transform_1, window_bounds = array<i64: 1, 128>}, {transform_indices = @transform_2, window_bounds = array<i64: 3>}, {pipeline_mode = #tpu.pipeline_mode<synchronous>, transform_indices = @transform_3, window_bounds = array<i64: 1, 1>}, {pipeline_mode = #tpu.pipeline_mode<synchronous>, transform_indices = @transform_4, window_bounds = array<i64: 1, 3>}]} {
    %c0_i32 = arith.constant 0 : i32
    %0 = arith.cmpi eq, %arg0, %c0_i32 : i32
    %1 = arith.extui %0 : i1 to i32
    %c0_i32_0 = arith.constant 0 : i32
    %2 = arith.cmpi ne, %1, %c0_i32_0 : i32
    scf.if %2 {
      %cst_10 = arith.constant 0.000000e+00 : f32
      %15 = vector.broadcast %cst_10 : f32 to vector<8x128xf32>
      %c0_11 = arith.constant 0 : index
      %c0_12 = arith.constant 0 : index
      %16 = vector.load %arg6[%c0_11, %c0_12] : memref<8x128xf32, #tpu.memory_space<vmem>>, vector<8x128xf32>
      tpu.vector_store %arg6[%c0_11, %c0_12], %15 {strides = array<i32>} : memref<8x128xf32, #tpu.memory_space<vmem>>, vector<8x128xf32>,
    } else {
    }
    %c0 = arith.constant 0 : index
    %c0_1 = arith.constant 0 : index
    %3 = vector.load %arg1[%c0, %c0_1] : memref<1x128xf32, #tpu.memory_space<vmem>>, vector<1x128xf32>
    %c0_2 = arith.constant 0 : index
    %c0_3 = arith.constant 0 : index
    %4 = vector.load %arg2[%c0_2, %c0_3] : memref<1x128xf32, #tpu.memory_space<vmem>>, vector<1x128xf32>
    %5 = arith.subf %3, %4 : vector<1x128xf32>
    %6 = math.absf %5 : vector<1x128xf32>
    %c0_4 = arith.constant 0 : index
    %c0_5 = arith.constant 0 : index
    %7 = vector.load %arg6[%c0_4, %c0_5] : memref<8x128xf32, #tpu.memory_space<vmem>>, vector<1x128xf32>
    %cst = arith.constant dense<0.000000e+00> : vector<128xf32>
    %8 = vector.multi_reduction <add>, %6, %cst [0] : vector<1x128xf32> to vector<128xf32>
    %9 = vector.shape_cast %8 : vector<128xf32> to vector<1x128xf32>
    %10 = arith.addf %7, %9 : vector<1x128xf32>
    %c0_6 = arith.constant 0 : index
    %c0_7 = arith.constant 0 : index
    %11 = vector.load %arg6[%c0_6, %c0_7] : memref<8x128xf32, #tpu.memory_space<vmem>>, vector<1x128xf32>
    tpu.vector_store %arg6[%c0_6, %c0_7], %10 {strides = array<i32>} : memref<8x128xf32, #tpu.memory_space<vmem>>, vector<1x128xf32>,
    %c0_i32_8 = arith.constant 0 : i32
    %12 = arith.cmpi eq, %arg0, %c0_i32_8 : i32
    %13 = arith.extui %12 : i1 to i32
    %c0_i32_9 = arith.constant 0 : i32
    %14 = arith.cmpi ne, %13, %c0_i32_9 : i32
    scf.if %14 {
      %c0_10 = arith.constant 0 : index
      %c0_11 = arith.constant 0 : index
      %15 = vector.load %arg6[%c0_10, %c0_11] : memref<8x128xf32, #tpu.memory_space<vmem>>, vector<8x128xf32>
      %cst_12 = arith.constant dense<0.000000e+00> : vector<128xf32>
      %16 = vector.multi_reduction <add>, %15, %cst_12 [0] : vector<8x128xf32> to vector<128xf32>
      %17 = vector.shape_cast %16 : vector<128xf32> to vector<1x128xf32>
      %18 = tpu.iota {dimensions = array<i32: 1>} : vector<1x128xi32>
      %c8_i32 = arith.constant 8 : i32
      %c0_i32_13 = arith.constant 0 : i32
      %19 = arith.cmpi eq, %c8_i32, %c0_i32_13 : i32
      %c1_i32 = arith.constant 1 : i32
      %20 = arith.select %19, %c1_i32, %c8_i32 : i32
      %21 = vector.broadcast %20 : i32 to vector<1x128xi32>
      %22 = arith.remsi %18, %21 : vector<1x128xi32>
      %c0_i32_14 = arith.constant 0 : i32
      %23 = vector.broadcast %c0_i32_14 : i32 to vector<1x128xi32>
      %24 = arith.cmpi ne, %22, %23 : vector<1x128xi32>
      %c0_i32_15 = arith.constant 0 : i32
      %25 = vector.broadcast %c0_i32_15 : i32 to vector<1x128xi32>
      %26 = arith.cmpi slt, %22, %25 : vector<1x128xi32>
      %c0_i32_16 = arith.constant 0 : i32
      %27 = arith.cmpi slt, %20, %c0_i32_16 : i32
      %28 = vector.broadcast %27 : i1 to vector<1x128xi1>
      %29 = vector.broadcast %28 : vector<1x128xi1> to vector<1x128xi1>
      %30 = arith.xori %26, %29 : vector<1x128xi1>
      %31 = arith.andi %30, %24 : vector<1x128xi1>
      %32 = vector.broadcast %20 : i32 to vector<1x128xi32>
      %33 = arith.addi %22, %32 : vector<1x128xi32>
      %34 = arith.select %31, %33, %22 : vector<1x128xi1>, vector<1x128xi32>
      %35 = tpu.iota {dimensions = array<i32: 1>} : vector<1x3xi32>
      %cst_17 = arith.constant 0.000000e+00 : f32
      %36 = vector.broadcast %cst_17 : f32 to vector<1x3xf32>
      %cst_18 = arith.constant 0.000000e+00 : f32
      %37 = vector.broadcast %cst_18 : f32 to vector<1x3xf32>
      %c0_i32_19 = arith.constant 0 : i32
      %38 = vector.broadcast %c0_i32_19 : i32 to vector<1x128xi32>
      %39 = arith.cmpi sge, %34, %38 : vector<1x128xi32>
      %c2_i32 = arith.constant 2 : i32
      %40 = vector.broadcast %c2_i32 : i32 to vector<1x128xi32>
      %41 = arith.cmpi slt, %34, %40 : vector<1x128xi32>
      %42 = arith.andi %39, %41 : vector<1x128xi1>
      %cst_20 = arith.constant 0.000000e+00 : f32
      %43 = vector.broadcast %cst_20 : f32 to vector<1x128xf32>
      %44 = arith.select %42, %17, %43 : vector<1x128xi1>, vector<1x128xf32>
      %45 = vector.shape_cast %44 : vector<1x128xf32> to vector<1x1x128xf32>
      %cst_21 = arith.constant dense<0.000000e+00> : vector<1xf32>
      %46 = vector.multi_reduction <add>, %45, %cst_21 [1, 2] : vector<1x1x128xf32> to vector<1xf32>
      %47 = vector.shape_cast %46 : vector<1xf32> to vector<1x1x1xf32>
      %48 = vector.extract %47[0, 0, 0] : f32 from vector<1x1x1xf32>
      %c0_i32_22 = arith.constant 0 : i32
      %49 = vector.broadcast %c0_i32_22 : i32 to vector<1x3xi32>
      %50 = arith.cmpi eq, %35, %49 : vector<1x3xi32>
      %cst_23 = arith.constant 1.562500e-02 : f32
      %51 = arith.mulf %cst_23, %48 : f32
      %52 = vector.broadcast %51 : f32 to vector<1x3xf32>
      %53 = arith.select %50, %52, %36 : vector<1x3xi1>, vector<1x3xf32>
      %c0_i32_24 = arith.constant 0 : i32
      %54 = vector.broadcast %c0_i32_24 : i32 to vector<1x3xi32>
      %55 = arith.cmpi eq, %35, %54 : vector<1x3xi32>
      %c0_25 = arith.constant 0 : index
      %56 = memref.load %arg3[%c0_25] : memref<3xf32, #tpu.memory_space<smem>>
      %57 = vector.broadcast %56 : f32 to vector<1x3xf32>
      %58 = arith.select %55, %57, %37 : vector<1x3xi1>, vector<1x3xf32>
      %c2_i32_26 = arith.constant 2 : i32
      %59 = vector.broadcast %c2_i32_26 : i32 to vector<1x128xi32>
      %60 = arith.cmpi sge, %34, %59 : vector<1x128xi32>
      %c4_i32 = arith.constant 4 : i32
      %61 = vector.broadcast %c4_i32 : i32 to vector<1x128xi32>
      %62 = arith.cmpi slt, %34, %61 : vector<1x128xi32>
      %63 = arith.andi %60, %62 : vector<1x128xi1>
      %cst_27 = arith.constant 0.000000e+00 : f32
      %64 = vector.broadcast %cst_27 : f32 to vector<1x128xf32>
      %65 = arith.select %63, %17, %64 : vector<1x128xi1>, vector<1x128xf32>
      %66 = vector.shape_cast %65 : vector<1x128xf32> to vector<1x1x128xf32>
      %cst_28 = arith.constant dense<0.000000e+00> : vector<1xf32>
      %67 = vector.multi_reduction <add>, %66, %cst_28 [1, 2] : vector<1x1x128xf32> to vector<1xf32>
      %68 = vector.shape_cast %67 : vector<1xf32> to vector<1x1x1xf32>
      %69 = vector.extract %68[0, 0, 0] : f32 from vector<1x1x1xf32>
      %c1_i32_29 = arith.constant 1 : i32
      %70 = vector.broadcast %c1_i32_29 : i32 to vector<1x3xi32>
      %71 = arith.cmpi eq, %35, %70 : vector<1x3xi32>
      %cst_30 = arith.constant 1.562500e-02 : f32
      %72 = arith.mulf %cst_30, %69 : f32
      %73 = vector.broadcast %72 : f32 to vector<1x3xf32>
      %74 = arith.select %71, %73, %53 : vector<1x3xi1>, vector<1x3xf32>
      %c1_i32_31 = arith.constant 1 : i32
      %75 = vector.broadcast %c1_i32_31 : i32 to vector<1x3xi32>
      %76 = arith.cmpi eq, %35, %75 : vector<1x3xi32>
      %c1 = arith.constant 1 : index
      %77 = memref.load %arg3[%c1] : memref<3xf32, #tpu.memory_space<smem>>
      %78 = vector.broadcast %77 : f32 to vector<1x3xf32>
      %79 = arith.select %76, %78, %58 : vector<1x3xi1>, vector<1x3xf32>
      %c4_i32_32 = arith.constant 4 : i32
      %80 = vector.broadcast %c4_i32_32 : i32 to vector<1x128xi32>
      %81 = arith.cmpi sge, %34, %80 : vector<1x128xi32>
      %c8_i32_33 = arith.constant 8 : i32
      %82 = vector.broadcast %c8_i32_33 : i32 to vector<1x128xi32>
      %83 = arith.cmpi slt, %34, %82 : vector<1x128xi32>
      %84 = arith.andi %81, %83 : vector<1x128xi1>
      %cst_34 = arith.constant 0.000000e+00 : f32
      %85 = vector.broadcast %cst_34 : f32 to vector<1x128xf32>
      %86 = arith.select %84, %17, %85 : vector<1x128xi1>, vector<1x128xf32>
      %87 = vector.shape_cast %86 : vector<1x128xf32> to vector<1x1x128xf32>
      %cst_35 = arith.constant dense<0.000000e+00> : vector<1xf32>
      %88 = vector.multi_reduction <add>, %87, %cst_35 [1, 2] : vector<1x1x128xf32> to vector<1xf32>
      %89 = vector.shape_cast %88 : vector<1xf32> to vector<1x1x1xf32>
      %90 = vector.extract %89[0, 0, 0] : f32 from vector<1x1x1xf32>
      %c2_i32_36 = arith.constant 2 : i32
      %91 = vector.broadcast %c2_i32_36 : i32 to vector<1x3xi32>
      %92 = arith.cmpi eq, %35, %91 : vector<1x3xi32>
      %cst_37 = arith.constant 7.812500e-03 : f32
      %93 = arith.mulf %cst_37, %90 : f32
      %94 = vector.broadcast %93 : f32 to vector<1x3xf32>
      %95 = arith.select %92, %94, %74 : vector<1x3xi1>, vector<1x3xf32>
      %c2_i32_38 = arith.constant 2 : i32
      %96 = vector.broadcast %c2_i32_38 : i32 to vector<1x3xi32>
      %97 = arith.cmpi eq, %35, %96 : vector<1x3xi32>
      %c2 = arith.constant 2 : index
      %98 = memref.load %arg3[%c2] : memref<3xf32, #tpu.memory_space<smem>>
      %99 = vector.broadcast %98 : f32 to vector<1x3xf32>
      %100 = arith.select %97, %99, %79 : vector<1x3xi1>, vector<1x3xf32>
      %cst_39 = arith.constant -2.000000e+00 : f32
      %101 = vector.broadcast %cst_39 : f32 to vector<1x3xf32>
      %102 = arith.mulf %101, %100 : vector<1x3xf32>
      %103 = math.exp %102 : vector<1x3xf32>
      %104 = arith.mulf %95, %103 : vector<1x3xf32>
      %c0_40 = arith.constant 0 : index
      %c0_41 = arith.constant 0 : index
      %105 = vector.load %arg5[%c0_40, %c0_41] : memref<1x3xf32, #tpu.memory_space<vmem>>, vector<1x3xf32>
      tpu.vector_store %arg5[%c0_40, %c0_41], %104 {strides = array<i32>} : memref<1x3xf32, #tpu.memory_space<vmem>>, vector<1x3xf32>,
      %106 = vector.shape_cast %104 : vector<1x3xf32> to vector<1x1x3xf32>
      %cst_42 = arith.constant dense<0.000000e+00> : vector<1xf32>
      %107 = vector.multi_reduction <add>, %106, %cst_42 [1, 2] : vector<1x1x3xf32> to vector<1xf32>
      %108 = vector.shape_cast %107 : vector<1xf32> to vector<1x1x1xf32>
      %109 = vector.extract %108[0, 0, 0] : f32 from vector<1x1x1xf32>
      %110 = vector.shape_cast %100 : vector<1x3xf32> to vector<1x1x3xf32>
      %cst_43 = arith.constant dense<0.000000e+00> : vector<1xf32>
      %111 = vector.multi_reduction <add>, %110, %cst_43 [1, 2] : vector<1x1x3xf32> to vector<1xf32>
      %112 = vector.shape_cast %111 : vector<1xf32> to vector<1x1x1xf32>
      %113 = vector.extract %112[0, 0, 0] : f32 from vector<1x1x1xf32>
      %114 = arith.addf %109, %113 : f32
      %115 = vector.broadcast %114 : f32 to vector<1x1xf32>
      %c0_44 = arith.constant 0 : index
      %c0_45 = arith.constant 0 : index
      %116 = vector.load %arg4[%c0_44, %c0_45] : memref<1x1xf32, #tpu.memory_space<vmem>>, vector<1x1xf32>
      tpu.vector_store %arg4[%c0_44, %c0_45], %115 {strides = array<i32>} : memref<1x1xf32, #tpu.memory_space<vmem>>, vector<1x1xf32>,
    } else {
    }
    return
  }
  func.func @transform_0(%arg0: i32) -> (i32, i32) {
    %c0_i32 = arith.constant 0 : i32
    %c0_i32_0 = arith.constant 0 : i32
    return %arg0, %c0_i32 : i32, i32
  }
  func.func @transform_1(%arg0: i32) -> (i32, i32) {
    %c0_i32 = arith.constant 0 : i32
    %c0_i32_0 = arith.constant 0 : i32
    return %arg0, %c0_i32 : i32, i32
  }
  func.func @transform_2(%arg0: i32) -> i32 {
    %c0_i32 = arith.constant 0 : i32
    %c0_i32_0 = arith.constant 0 : i32
    return %c0_i32 : i32
  }
  func.func @transform_3(%arg0: i32) -> (i32, i32) {
    %c0_i32 = arith.constant 0 : i32
    %c0_i32_0 = arith.constant 0 : i32
    %c0_i32_1 = arith.constant 0 : i32
    return %c0_i32, %c0_i32_0 : i32, i32
  }
  func.func @transform_4(%arg0: i32) -> (i32, i32) {
    %c0_i32 = arith.constant 0 : i32
    %c0_i32_0 = arith.constant 0 : i32
    %c0_i32_1 = arith.constant 0 : i32
    return %c0_i32, %c0_i32_0 : i32, i32
  }
}

</mosaic_0001>

<llo_original>
// kernel: tpu_custom_call.1
$region0: #{tpu_custom_call.1}
  #allocation0 [shape = 'u32[]', space=smem, size = 0x4, offset = 0x4, fixed_abs, tag = 'smem constant byte address 0x4 - core index']
  #allocation1 [shape = 'u32[144,128]{1,0:T(1,128)}', space=vmem, size = 0x12000, scoped, tag = 'internal scratch']
  #allocation2 [shape = 'f32[8,128]{1,0:T(8,128)}', space=vmem, size = 0x1000, scoped, tag = 'scratch operand']
  %s0 = inlined_call_operand.hbm [shape: f32[1,128], index: 0, kind: input, shape index: {}]
  %s1 = inlined_call_operand.vmem [shape: f32[1,128], index: 1, kind: input, shape index: {}]
  %s2 = inlined_call_operand.vmem [shape: f32[3], index: 2, kind: input, shape index: {}]
  %s3 = inlined_call_operand.hbm [shape: f32[1,1], index: 3, kind: output, shape index: {0}]
  %s4 = inlined_call_operand.hbm [shape: f32[1,3], index: 4, kind: output, shape index: {1}]
  %5 = xla_tuple %s3, %s4
  %s6 = sld [smem:[#allocation0]]
  $region46: #{tpu_custom_call.1} parent=0
    _
  %s8 = ssub.s32 1, %s6
  %s9 = scalar_select 0, %s8, %s6
  $region1: #{tpu_custom_call.1} parent=0
    #allocation3 [shape = 'u8[512]{0}', space=vmem, size = 0x400, scoped, tag = 'input window, operand 0, single buffered']
    #allocation4 [shape = 's32[1]{0}', space=sflag, size = 0x4, scoped, tag = 'scoped memory for tpu_custom_call.1']
    #allocation5 [shape = 's32[1]{0}', space=sflag, size = 0x4, scoped, tag = 'scoped memory for tpu_custom_call.1']
    #allocation6 [shape = 's32[1]{0}', space=sflag, size = 0x4, scoped, tag = 'scoped memory for tpu_custom_call.1']
    #allocation7 [shape = 'u8[512]{0}', space=smem, size = 0x200, scoped, tag = 'input window, operand 2, single buffered']
    #allocation8 [shape = 'u8[512]{0}', space=vmem, size = 0x400, scoped, tag = 'output window, operand 0, single buffered']
    #allocation9 [shape = 'u8[512]{0}', space=vmem, size = 0x400, scoped, tag = 'output window, operand 1, single buffered']
    #allocation10 [shape = 's32[1]{0}', space=sflag, size = 0x4, scoped, tag = 'scoped memory for tpu_custom_call.1']
    %10 = vsyncpa [#allocation4], 0
    %11 = vsyncpa [#allocation6], 0
    %12 = vsyncpa [#allocation5], 0
    %13 = vsyncpa [#allocation10], 0
    // Predicated region
    $region2: #{tpu_custom_call.1} parent=1 // pred_check
      _
    $region3: #{tpu_custom_call.1} parent=1 // pred_check_branch
      %15 = sbr.rel (0) target = $region5
    $region4: #{tpu_custom_call.1} parent=1 // pred_region
      %s17 = ssub.s32 16, 16
      %18 = vsyncadd [#allocation4], %s17
      %s20 = sshll.u32 [#allocation3], 4
      %s21 = int_to_ptr.vmem [resolvable:$true] %s20
      %23 = dma.hbm_to_vmem [thread:$0]  %s0, 16, %s21, [#allocation4]
    $region5: #{tpu_custom_call.1} parent=1 // pred_fallthru
      _
    // Predicated region
    $region6: #{tpu_custom_call.1} parent=1 // pred_check
      _
    $region7: #{tpu_custom_call.1} parent=1 // pred_check_branch
      %25 = sbr.rel (0) target = $region9
    $region8: #{tpu_custom_call.1} parent=1 // pred_region
      _
    $region9: #{tpu_custom_call.1} parent=1 // pred_fallthru
      _
    // Predicated region
    $region10: #{tpu_custom_call.1} parent=1 // pred_check
      _
    $region11: #{tpu_custom_call.1} parent=1 // pred_check_branch
      %27 = sbr.rel (0) target = $region13
    $region12: #{tpu_custom_call.1} parent=1 // pred_region
      %s29 = ssub.s32 16, 16
      %30 = vsyncadd [#allocation6], %s29
      %s32 = sshll.u32 %s2, 4
      %s33 = int_to_ptr.vmem [resolvable:$true] %s32
      %35 = dma.vmem_to_smem %s33, 16, [#allocation7], [#allocation6]
    $region13: #{tpu_custom_call.1} parent=1 // pred_fallthru
      _
    // Predicated region
    $region14: #{tpu_custom_call.1} parent=1 // pred_check
      _
    $region15: #{tpu_custom_call.1} parent=1 // pred_check_branch
      %37 = sbr.rel (0) target = $region17
    $region16: #{tpu_custom_call.1} parent=1 // pred_region
      %38 = dma.done [#allocation4], 16
    $region17: #{tpu_custom_call.1} parent=1 // pred_fallthru
      _
    // Predicated region
    $region18: #{tpu_custom_call.1} parent=1 // pred_check
      _
    $region19: #{tpu_custom_call.1} parent=1 // pred_check_branch
      %40 = sbr.rel (0) target = $region21
    $region20: #{tpu_custom_call.1} parent=1 // pred_region
      %41 = dma.done [#allocation6], 16
    $region21: #{tpu_custom_call.1} parent=1 // pred_fallthru
      _
    %42 = sfence
    %p43 = scmp.eq.s32.totalorder 0, 0
    // Predicated region
    $region22: #{tpu_custom_call.1} parent=1 // pred_check
      %p44 = pneg %p43
    $region23: #{tpu_custom_call.1} parent=1 // pred_check_branch
      %46 = sbr.rel (%p44) target = $region25
    $region24: #{tpu_custom_call.1} parent=1 // pred_region
      %47 = vst [vmem:[#allocation2] sm:$0xff] 0.0
    $region25: #{tpu_custom_call.1} parent=1 // pred_fallthru
      _
    %v48 = vld [vmem:[#allocation3] sm:$0x1]
    %v49 = vld [vmem:[%s1] sm:$0x1]
    %v50 = vsub.f32 %v48, %v49
    %v51 = vand.u32 2147483647, %v50
    %v52 = vld [vmem:[#allocation2] sm:$0x1]
    %v53 = vadd.f32 %v51, 0.0
    %v54 = vadd.f32 %v52, %v53
    %55 = vst [vmem:[#allocation2] sm:$0x1] %v54
    // Predicated region
    $region26: #{tpu_custom_call.1} parent=1 // pred_check
      %p56 = pneg %p43
    $region27: #{tpu_custom_call.1} parent=1 // pred_check_branch
      %58 = sbr.rel (%p56) target = $region29
    $region28: #{tpu_custom_call.1} parent=1 // pred_region
      %v59 = vld [vmem:[#allocation2] sm:$0xff]
      %v60 = vrot.slane %v59, 4
      %v61 = vadd.f32 %v59, %v60
      %v62 = vrot.slane %v61, 2
      %v63 = vadd.f32 %v61, %v62
      %v64 = vrot.slane %v63, 1
      %v65 = vadd.f32 %v63, %v64
      %v66 = vlaneseq
      %v67 = vand.u32 %v66, 127
      %vm68 = vcmp.lt.s32.totalorder %v67, 0
      %v69 = vsub.s32 0, %v67
      %v70 = vsel %vm68, %v69, %v67
      %v71 = vshrl.u32 %v70, 3
      %v72 = vand.u32 %v70, 7
      %v73 = vsub.s32 0, %v72
      %v74 = vsel %vm68, %v73, %v72
      %vm75 = vcmp.ne.s32.totalorder %v74, 0
      %vm76 = vcmp.lt.s32.totalorder %v74, 0
      %vm77 = vmand %vm76, %vm75
      %v78 = vadd.s32 %v74, 8
      %v79 = vsel %vm77, %v78, %v74
      %vm80 = vcmp.ge.s32.totalorder %v79, 0
      %vm81 = vcmp.lt.s32.totalorder %v79, 2
      %vm82 = vmand %vm80, %vm81
      %v83 = vsel %vm82, %v65, 0.0
      %vm84 = vcmask 1040384
      %v85 = vsel %vm84, %v83, 0.0
      %86 = vadd.xlane.f32.xlu0 %v85
      %v87 = vpop.xlane.xlu0 %86
      %v88 = vrot.slane %v87, 4
      %v89 = vadd.f32 %v87, %v88
      %v90 = vrot.slane %v89, 2
      %v91 = vadd.f32 %v89, %v90
      %v92 = vrot.slane %v91, 1
      %v93 = vadd.f32 %v91, %v92
      %s94 = vtos %v93
      %vm95 = vcmp.eq.s32.totalorder %v67, 0
      %s96 = smul.f32 %s94, 0.015625
      %v97 = vstv %s96
      %v98 = vsel %vm95, %v97, 0.0
      %s99 = sld [smem:[#allocation7]]
      %v100 = vstv %s99
      %v101 = vsel %vm95, %v100, 0.0
      %vm102 = vcmp.ge.s32.totalorder %v79, 2
      %vm103 = vcmp.lt.s32.totalorder %v79, 4
      %vm104 = vmand %vm102, %vm103
      %v105 = vsel %vm104, %v65, 0.0
      %v106 = vsel %vm84, %v105, 0.0
      %107 = vadd.xlane.f32.xlu0 %v106
      %v108 = vpop.xlane.xlu0 %107
      %v109 = vrot.slane %v108, 4
      %v110 = vadd.f32 %v108, %v109
      %v111 = vrot.slane %v110, 2
      %v112 = vadd.f32 %v110, %v111
      %v113 = vrot.slane %v112, 1
      %v114 = vadd.f32 %v112, %v113
      %s115 = vtos %v114
      %vm116 = vcmp.eq.s32.totalorder %v67, 1
      %s117 = smul.f32 %s115, 0.015625
      %v118 = vstv %s117
      %v119 = vsel %vm116, %v118, %v98
      %s120 = sld [smem:[#allocation7 + $0x1]]
      %v121 = vstv %s120
      %v122 = vsel %vm116, %v121, %v101
      %vm123 = vcmp.ge.s32.totalorder %v79, 4
      %vm124 = vcmp.lt.s32.totalorder %v79, 8
      %vm125 = vmand %vm123, %vm124
      %v126 = vsel %vm125, %v65, 0.0
      %v127 = vsel %vm84, %v126, 0.0
      %128 = vadd.xlane.f32.xlu0 %v127
      %v129 = vpop.xlane.xlu0 %128
      %v130 = vrot.slane %v129, 4
      %v131 = vadd.f32 %v129, %v130
      %v132 = vrot.slane %v131, 2
      %v133 = vadd.f32 %v131, %v132
      %v134 = vrot.slane %v133, 1
      %v135 = vadd.f32 %v133, %v134
      %s136 = vtos %v135
      %vm137 = vcmp.eq.s32.totalorder %v67, 2
      %s138 = smul.f32 %s136, 0.0078125
      %v139 = vstv %s138
      %v140 = vsel %vm137, %v139, %v119
      %s141 = sld [smem:[#allocation7 + $0x2]]
      %v142 = vstv %s141
      %v143 = vsel %vm137, %v142, %v122
      %v144 = vmul.f32 %v143, -2.0
      %v145 = vmul.f32 %v144, 1.442695
      %v146 = vpow.pop %v145
      %v147 = vmul.f32 %v140, %v146
      %vm148 = vcmask 16384
      %149 = vst.msk [vmem:[#allocation9] sm:$0x1] %vm148, %v147
      %v150 = vsel %vm148, %v147, 0.0
      %151 = vadd.xlane.f32.xlu0 %v150
      %v152 = vpop.xlane.xlu0 %151
      %v153 = vrot.slane %v152, 4
      %v154 = vadd.f32 %v152, %v153
      %v155 = vrot.slane %v154, 2
      %v156 = vadd.f32 %v154, %v155
      %v157 = vrot.slane %v156, 1
      %v158 = vadd.f32 %v156, %v157
      %s159 = vtos %v158
      %v160 = vsel %vm148, %v143, 0.0
      %161 = vadd.xlane.f32.xlu0 %v160
      %v162 = vpop.xlane.xlu0 %161
      %v163 = vrot.slane %v162, 4
      %v164 = vadd.f32 %v162, %v163
      %v165 = vrot.slane %v164, 2
      %v166 = vadd.f32 %v164, %v165
      %v167 = vrot.slane %v166, 1
      %v168 = vadd.f32 %v166, %v167
      %s169 = vtos %v168
      %s170 = sadd.f32 %s159, %s169
      %v171 = vstv %s170
      %vm172 = vcmask 0
      %173 = vst.msk [vmem:[#allocation8] sm:$0x1] %vm172, %v171
    $region29: #{tpu_custom_call.1} parent=1 // pred_fallthru
      _
    // Predicated region
    $region30: #{tpu_custom_call.1} parent=1 // pred_check
      _
    $region31: #{tpu_custom_call.1} parent=1 // pred_check_branch
      %175 = sbr.rel (0) target = $region33
    $region32: #{tpu_custom_call.1} parent=1 // pred_region
      %s177 = ssub.s32 16, 16
      %178 = vsyncadd [#allocation5], %s177
      %s180 = sshll.u32 [#allocation8], 4
      %s181 = int_to_ptr.vmem [resolvable:$true] %s180
      %183 = dma.vmem_to_hbm [thread:$0]  %s181, 16, %s3, [#allocation5]
    $region33: #{tpu_custom_call.1} parent=1 // pred_fallthru
      _
    // Predicated region
    $region34: #{tpu_custom_call.1} parent=1 // pred_check
      _
    $region35: #{tpu_custom_call.1} parent=1 // pred_check_branch
      %185 = sbr.rel (0) target = $region37
    $region36: #{tpu_custom_call.1} parent=1 // pred_region
      %s187 = ssub.s32 16, 16
      %188 = vsyncadd [#allocation10], %s187
      %s190 = sshll.u32 [#allocation9], 4
      %s191 = int_to_ptr.vmem [resolvable:$true] %s190
      %193 = dma.vmem_to_hbm [thread:$0]  %s191, 16, %s4, [#allocation10]
    $region37: #{tpu_custom_call.1} parent=1 // pred_fallthru
      _
    // Predicated region
    $region38: #{tpu_custom_call.1} parent=1 // pred_check
      _
    $region39: #{tpu_custom_call.1} parent=1 // pred_check_branch
      %195 = sbr.rel (0) target = $region41
    $region40: #{tpu_custom_call.1} parent=1 // pred_region
      %196 = dma.done [#allocation5], 16
    $region41: #{tpu_custom_call.1} parent=1 // pred_fallthru
      _
    // Predicated region
    $region42: #{tpu_custom_call.1} parent=1 // pred_check
      _
    $region43: #{tpu_custom_call.1} parent=1 // pred_check_branch
      %198 = sbr.rel (0) target = $region45
    $region44: #{tpu_custom_call.1} parent=1 // pred_region
      %199 = dma.done [#allocation10], 16
    $region45: #{tpu_custom_call.1} parent=1 // pred_fallthru
      _
    %200 = vsyncpa [#allocation4], 1
    %201 = vsyncpa [#allocation5], 1
    %202 = vsyncpa [#allocation10], 1
    %203 = vsyncpa [#allocation6], 1

</llo_original>
